<compile_context>
chip_gen: v6e
topology: v6e:2x2x1
jax: 0.10.0
libtpu: 0.0.40
codegen_flags: <defaults>
</compile_context>

<pallas_src>
import functools

import jax
import jax.numpy as jnp
from jax import lax
from jax.experimental import pallas as pl
from jax.experimental.pallas import tpu as pltpu


def _focal_loss_kernel(x_ref, t_ref, out_ref, *, gamma, int_gamma, n_elems,
                       block_rows, lane, masked, binary_target):
    x = x_ref[...].astype(jnp.float32)
    t = t_ref[...].astype(jnp.float32)

    # softplus(-x) = max(-x, 0) + log1p(exp(-|x|))   (one exp, one log1p)
    e_x = jnp.exp(-jnp.abs(x))
    lg_x = jnp.log1p(e_x)
    loss = x - x * t + jnp.maximum(-x, 0.0) + lg_x

    z = -x * (t * 2.0 - 1.0)
    if binary_target:
        # For binary targets |z| == |x|: reuse exp(-|x|) / log1p(exp(-|x|)).
        e_z, lg_z = e_x, lg_x
    else:
        e_z = jnp.exp(-jnp.abs(z))
        lg_z = jnp.log1p(e_z)

    if int_gamma is not None:
        # exp(gamma * logsigmoid(z)) == sigmoid(z)**gamma; for integer gamma
        # this is pure VPU work (no extra exp):
        #   sigmoid(z) = where(z >= 0, 1, exp(z)) / (1 + exp(-|z|))
        sig = jnp.where(z >= 0.0, 1.0, e_z) / (1.0 + e_z)
        if int_gamma == 0:
            w = jnp.ones_like(sig)
        else:
            w = sig
            for _ in range(int_gamma - 1):
                w = w * sig
    else:
        invprobs = jnp.minimum(z, 0.0) - lg_z          # stable logsigmoid(z)
        w = jnp.exp(invprobs * gamma)

    loss = w * loss

    if masked:
        i = pl.program_id(0)
        row = lax.broadcasted_iota(jnp.int32, (block_rows, lane), 0)
        col = lax.broadcasted_iota(jnp.int32, (block_rows, lane), 1)
        idx = (i * block_rows + row) * lane + col
        loss = jnp.where(idx < n_elems, loss, 0.0)

    # Fold the (block_rows, 128) tile down to one (8, 128) vreg with VPU adds;
    # the single cross-lane/sublane reduce happens once, in the wrapper.
    partial = loss.reshape(block_rows // 8, 8, lane).sum(axis=0)
    out_ref[...] = partial[None]


def focal_loss(x, target, gamma, *, block_rows=1024, lane=128,
               binary_target=True):
    """Mean binary focal loss of logits `x` against `target` (same shape)."""
    assert x.shape == target.shape
    n = x.size

    x_flat = x.reshape(-1)
    t_flat = target.reshape(-1)

    # Row tiling: rows of 128 lanes, row-block a multiple of 8 sublanes.
    rows = pl.cdiv(n, lane)
    rows8 = ((rows + 7) // 8) * 8
    block_rows = max(8, (int(block_rows) // 8) * 8)
    block_rows = min(block_rows, rows8)
    grid_rows = ((rows8 + block_rows - 1) // block_rows) * block_rows
    padded_n = grid_rows * lane
    masked = padded_n != n
    if masked:
        x_flat = jnp.pad(x_flat, (0, padded_n - n))
        t_flat = jnp.pad(t_flat, (0, padded_n - n))
    x2 = x_flat.reshape(grid_rows, lane)
    t2 = t_flat.reshape(grid_rows, lane)
    grid = grid_rows // block_rows

    g = float(gamma)
    int_gamma = int(g) if (g.is_integer() and 0 <= g <= 8) else None

    kernel = functools.partial(
        _focal_loss_kernel, gamma=g, int_gamma=int_gamma, n_elems=n,
        block_rows=block_rows, lane=lane, masked=masked,
        binary_target=binary_target)

    partials = pl.pallas_call(
        kernel,
        out_shape=jax.ShapeDtypeStruct((grid, 8, lane), jnp.float32),
        grid_spec=pltpu.PrefetchScalarGridSpec(
            num_scalar_prefetch=0,
            grid=(grid,),
            in_specs=[
                pl.BlockSpec((block_rows, lane), lambda i: (i, 0)),
                pl.BlockSpec((block_rows, lane), lambda i: (i, 0)),
            ],
            out_specs=pl.BlockSpec((1, 8, lane), lambda i: (i, 0, 0)),
        ),
        compiler_params=pltpu.CompilerParams(
            dimension_semantics=("parallel",)),
    )(x2, t2)

    # Tiny final reduce + mean (multiply by precomputed 1/n) in the wrapper.
    return jnp.sum(partials) * jnp.float32(1.0 / n)


def focal_loss_ref(x, target, gamma):
    """Direct port of the PyTorch FocalLoss.forward for verification."""
    x = x.astype(jnp.float32)
    t = target.astype(jnp.float32)
    max_val = jnp.maximum(-x, 0.0)
    loss = x - x * t + max_val + jnp.log(jnp.exp(-max_val) + jnp.exp(-x - max_val))
    invprobs = jax.nn.log_sigmoid(-x * (t * 2.0 - 1.0))
    loss = jnp.exp(invprobs * gamma) * loss
    return jnp.mean(loss)


if __name__ == "__main__":
    gamma = 2.0  # the module's only parameter (a constant, no weights)

    key = jax.random.PRNGKey(0)
    k1, k2 = jax.random.split(key)
    # Small NCHW logits / binary targets, consistent with a segmentation head.
    x = jax.random.normal(k1, (2, 4, 16, 16), dtype=jnp.float32) * 2.0
    target = (jax.random.uniform(k2, (2, 4, 16, 16)) > 0.5).astype(jnp.float32)

    out = focal_loss(x, target, gamma)
    out = jax.block_until_ready(out)

    ref = focal_loss_ref(x, target, gamma)
    assert jnp.allclose(out, ref, rtol=1e-5, atol=1e-5), (out, ref)

    print("KERNEL_OK")
</pallas_src>

<mosaic_0001>
module attributes {stable_mosaic.version = 11 : i64} {
  func.func @_focal_loss_kernel(%arg0: i32, %arg1: memref<16x128xf32, #tpu.memory_space<vmem>>, %arg2: memref<16x128xf32, #tpu.memory_space<vmem>>, %arg3: memref<1x8x128xf32, #tpu.memory_space<vmem>>) attributes {dimension_semantics = [#tpu.dimension_semantics<parallel>], iteration_bounds = array<i64: 1>, scalar_prefetch = 0 : i64, scratch_operands = 0 : i64, tpu.core_type = #tpu.core_type<tc>, window_params = [{transform_indices = @transform_0, window_bounds = array<i64: 16, 128>}, {transform_indices = @transform_1, window_bounds = array<i64: 16, 128>}, {transform_indices = @transform_2, window_bounds = array<i64: 1, 8, 128>}]} {
    %c0 = arith.constant 0 : index
    %c0_0 = arith.constant 0 : index
    %0 = vector.load %arg1[%c0, %c0_0] : memref<16x128xf32, #tpu.memory_space<vmem>>, vector<16x128xf32>
    %c0_1 = arith.constant 0 : index
    %c0_2 = arith.constant 0 : index
    %1 = vector.load %arg2[%c0_1, %c0_2] : memref<16x128xf32, #tpu.memory_space<vmem>>, vector<16x128xf32>
    %2 = math.absf %0 : vector<16x128xf32>
    %cst = arith.constant 0.000000e+00 : f32
    %3 = vector.broadcast %cst : f32 to vector<16x128xf32>
    %4 = arith.subf %3, %2 : vector<16x128xf32>
    %5 = math.exp %4 : vector<16x128xf32>
    %6 = math.log1p %5 : vector<16x128xf32>
    %7 = arith.mulf %0, %1 : vector<16x128xf32>
    %8 = arith.subf %0, %7 : vector<16x128xf32>
    %cst_3 = arith.constant 0.000000e+00 : f32
    %9 = vector.broadcast %cst_3 : f32 to vector<16x128xf32>
    %10 = arith.subf %9, %0 : vector<16x128xf32>
    %cst_4 = arith.constant 0.000000e+00 : f32
    %11 = vector.broadcast %cst_4 : f32 to vector<16x128xf32>
    %12 = arith.maximumf %10, %11 : vector<16x128xf32>
    %13 = arith.addf %8, %12 : vector<16x128xf32>
    %14 = arith.addf %13, %6 : vector<16x128xf32>
    %cst_5 = arith.constant 0.000000e+00 : f32
    %15 = vector.broadcast %cst_5 : f32 to vector<16x128xf32>
    %16 = arith.subf %15, %0 : vector<16x128xf32>
    %cst_6 = arith.constant 2.000000e+00 : f32
    %17 = vector.broadcast %cst_6 : f32 to vector<16x128xf32>
    %18 = arith.mulf %1, %17 : vector<16x128xf32>
    %cst_7 = arith.constant 1.000000e+00 : f32
    %19 = vector.broadcast %cst_7 : f32 to vector<16x128xf32>
    %20 = arith.subf %18, %19 : vector<16x128xf32>
    %21 = arith.mulf %16, %20 : vector<16x128xf32>
    %cst_8 = arith.constant 0.000000e+00 : f32
    %22 = vector.broadcast %cst_8 : f32 to vector<16x128xf32>
    %23 = arith.cmpf oge, %21, %22 : vector<16x128xf32>
    %cst_9 = arith.constant 1.000000e+00 : f32
    %24 = vector.broadcast %cst_9 : f32 to vector<16x128xf32>
    %25 = arith.select %23, %24, %5 : vector<16x128xi1>, vector<16x128xf32>
    %cst_10 = arith.constant 1.000000e+00 : f32
    %26 = vector.broadcast %cst_10 : f32 to vector<16x128xf32>
    %27 = arith.addf %26, %5 : vector<16x128xf32>
    %28 = arith.divf %25, %27 : vector<16x128xf32>
    %29 = arith.mulf %28, %28 : vector<16x128xf32>
    %30 = arith.mulf %29, %14 : vector<16x128xf32>
    %31 = vector.shape_cast %30 : vector<16x128xf32> to vector<2x8x128xf32>
    %cst_11 = arith.constant dense<0.000000e+00> : vector<8x128xf32>
    %32 = vector.multi_reduction <add>, %31, %cst_11 [0] : vector<2x8x128xf32> to vector<8x128xf32>
    %33 = vector.shape_cast %32 : vector<8x128xf32> to vector<1x8x128xf32>
    %c0_12 = arith.constant 0 : index
    %c0_13 = arith.constant 0 : index
    %c0_14 = arith.constant 0 : index
    %34 = vector.load %arg3[%c0_12, %c0_13, %c0_14] : memref<1x8x128xf32, #tpu.memory_space<vmem>>, vector<1x8x128xf32>
    tpu.vector_store %arg3[%c0_12, %c0_13, %c0_14], %33 {strides = array<i32>} : memref<1x8x128xf32, #tpu.memory_space<vmem>>, vector<1x8x128xf32>,
    return
  }
  func.func @transform_0(%arg0: i32) -> (i32, i32) {
    %c0_i32 = arith.constant 0 : i32
    %c0_i32_0 = arith.constant 0 : i32
    return %arg0, %c0_i32 : i32, i32
  }
  func.func @transform_1(%arg0: i32) -> (i32, i32) {
    %c0_i32 = arith.constant 0 : i32
    %c0_i32_0 = arith.constant 0 : i32
    return %arg0, %c0_i32 : i32, i32
  }
  func.func @transform_2(%arg0: i32) -> (i32, i32, i32) {
    %c0_i32 = arith.constant 0 : i32
    %c0_i32_0 = arith.constant 0 : i32
    %c0_i32_1 = arith.constant 0 : i32
    return %arg0, %c0_i32, %c0_i32_0 : i32, i32, i32
  }
}

</mosaic_0001>

<llo_original>
// kernel: tpu_custom_call.1
$region0: #{tpu_custom_call.1}
  #allocation0 [shape = 'u32[]', space=smem, size = 0x4, offset = 0x4, fixed_abs, tag = 'smem constant byte address 0x4 - core index']
  #allocation1 [shape = 'u32[144,128]{1,0:T(1,128)}', space=vmem, size = 0x12000, scoped, tag = 'internal scratch']
  %s0 = inlined_call_operand.hbm [shape: f32[16,128], index: 0, kind: input, shape index: {}]
  %s1 = inlined_call_operand.hbm [shape: f32[16,128], index: 1, kind: input, shape index: {}]
  %s2 = inlined_call_operand.hbm [shape: f32[1,8,128], index: 2, kind: output, shape index: {}]
  %s3 = sld [smem:[#allocation0]]
  $region26: #{tpu_custom_call.1} parent=0
    _
  %s5 = ssub.s32 1, %s3
  %s6 = scalar_select 0, %s5, %s3
  $region1: #{tpu_custom_call.1} parent=0
    #allocation2 [shape = 'u8[8192]{0}', space=vmem, size = 0x2000, scoped, tag = 'input window, operand 0, single buffered']
    #allocation3 [shape = 's32[1]{0}', space=sflag, size = 0x4, scoped, tag = 'scoped memory for tpu_custom_call.1']
    #allocation4 [shape = 's32[1]{0}', space=sflag, size = 0x4, scoped, tag = 'scoped memory for tpu_custom_call.1']
    #allocation5 [shape = 'u8[8192]{0}', space=vmem, size = 0x2000, scoped, tag = 'input window, operand 1, single buffered']
    #allocation6 [shape = 's32[1]{0}', space=sflag, size = 0x4, scoped, tag = 'scoped memory for tpu_custom_call.1']
    #allocation7 [shape = 'u8[4096]{0}', space=vmem, size = 0x1000, scoped, tag = 'output window, operand 0, single buffered']
    %7 = vsyncpa [#allocation3], 0
    %8 = vsyncpa [#allocation6], 0
    %9 = vsyncpa [#allocation4], 0
    // Predicated region
    $region2: #{tpu_custom_call.1} parent=1 // pred_check
      _
    $region3: #{tpu_custom_call.1} parent=1 // pred_check_branch
      %11 = sbr.rel (0) target = $region5
    $region4: #{tpu_custom_call.1} parent=1 // pred_region
      %s13 = ssub.s32 256, 256
      %14 = vsyncadd [#allocation3], %s13
      %s15 = sshll.u32 [#allocation2], 4
      %s16 = int_to_ptr.vmem [resolvable:$true] %s15
      %21 = dma.hbm_to_vmem [thread:$0]  %s0, 256, %s16, [#allocation3], 128, 128, 8
    $region5: #{tpu_custom_call.1} parent=1 // pred_fallthru
      _
    // Predicated region
    $region6: #{tpu_custom_call.1} parent=1 // pred_check
      _
    $region7: #{tpu_custom_call.1} parent=1 // pred_check_branch
      %23 = sbr.rel (0) target = $region9
    $region8: #{tpu_custom_call.1} parent=1 // pred_region
      %s25 = ssub.s32 256, 256
      %26 = vsyncadd [#allocation6], %s25
      %s27 = sshll.u32 [#allocation5], 4
      %s28 = int_to_ptr.vmem [resolvable:$true] %s27
      %33 = dma.hbm_to_vmem [thread:$0]  %s1, 256, %s28, [#allocation6], 128, 128, 8
    $region9: #{tpu_custom_call.1} parent=1 // pred_fallthru
      _
    // Predicated region
    $region10: #{tpu_custom_call.1} parent=1 // pred_check
      _
    $region11: #{tpu_custom_call.1} parent=1 // pred_check_branch
      %35 = sbr.rel (0) target = $region13
    $region12: #{tpu_custom_call.1} parent=1 // pred_region
      %36 = dma.done [#allocation3], 256
    $region13: #{tpu_custom_call.1} parent=1 // pred_fallthru
      _
    // Predicated region
    $region14: #{tpu_custom_call.1} parent=1 // pred_check
      _
    $region15: #{tpu_custom_call.1} parent=1 // pred_check_branch
      %38 = sbr.rel (0) target = $region17
    $region16: #{tpu_custom_call.1} parent=1 // pred_region
      %39 = dma.done [#allocation6], 256
    $region17: #{tpu_custom_call.1} parent=1 // pred_fallthru
      _
    %v40 = vld [vmem:[#allocation2] sm:$0xff]
    %v41 = vld [vmem:[#allocation2 + $0x8] sm:$0xff]
    %v42 = vld [vmem:[#allocation5] sm:$0xff]
    %v43 = vld [vmem:[#allocation5 + $0x8] sm:$0xff]
    %v44 = vand.u32 2147483647, %v40
    %v45 = vand.u32 2147483647, %v41
    %v46 = vsub.f32 0.0, %v44
    %v47 = vsub.f32 0.0, %v45
    %v48 = vmul.f32 %v46, 1.442695
    %v49 = vpow.pop %v48
    %v50 = vmul.f32 %v47, 1.442695
    %v51 = vpow.pop %v50
    %v52 = vadd.f32 %v49, 1.0
    %v53 = vlog2.pop %v52
    %v54 = vmul.f32 %v53, 0.6931472
    %v55 = vmul.f32 -0.5, %v49
    %v56 = vadd.f32 %v55, 1.0
    %v57 = vmul.f32 %v56, %v49
    %v58 = vand.u32 2147483647, %v49
    %vm59 = vcmp.lt.f32.partialorder %v58, 0.0004427343
    %v60 = vsel %vm59, %v57, %v54
    %v61 = vadd.f32 %v51, 1.0
    %v62 = vlog2.pop %v61
    %v63 = vmul.f32 %v62, 0.6931472
    %v64 = vmul.f32 -0.5, %v51
    %v65 = vadd.f32 %v64, 1.0
    %v66 = vmul.f32 %v65, %v51
    %v67 = vand.u32 2147483647, %v51
    %vm68 = vcmp.lt.f32.partialorder %v67, 0.0004427343
    %v69 = vsel %vm68, %v66, %v63
    %v70 = vmul.f32 %v40, %v42
    %v71 = vmul.f32 %v41, %v43
    %v72 = vsub.f32 %v40, %v70
    %v73 = vsub.f32 %v41, %v71
    %v74 = vsub.f32 0.0, %v40
    %v75 = vsub.f32 0.0, %v41
    %v76 = vmax.f32 %v74, 0.0
    %v77 = vmax.f32 %v75, 0.0
    %v78 = vadd.f32 %v72, %v76
    %v79 = vadd.f32 %v73, %v77
    %v80 = vadd.f32 %v78, %v60
    %v81 = vadd.f32 %v79, %v69
    %v82 = vmul.f32 %v42, 2.0
    %v83 = vmul.f32 %v43, 2.0
    %v84 = vsub.f32 %v82, 1.0
    %v85 = vsub.f32 %v83, 1.0
    %v86 = vmul.f32 %v74, %v84
    %v87 = vmul.f32 %v75, %v85
    %vm88 = vcmp.ge.f32.partialorder %v86, 0.0
    %vm89 = vcmp.ge.f32.partialorder %v87, 0.0
    %v90 = vsel %vm88, 1.0, %v49
    %v91 = vsel %vm89, 1.0, %v51
    %v92 = vadd.f32 %v49, 1.0
    %v93 = vadd.f32 %v51, 1.0
    %v94 = vrcp.pop %v92
    %v95 = vmul.f32 %v90, %v94
    %v96 = vrcp.pop %v93
    %v97 = vmul.f32 %v91, %v96
    %v98 = vmul.f32 %v95, %v95
    %v99 = vmul.f32 %v97, %v97
    %v100 = vmul.f32 %v98, %v80
    %v101 = vmul.f32 %v99, %v81
    %v102 = vadd.f32 %v100, %v101
    %103 = vst [vmem:[#allocation7] sm:$0xff] %v102
    // Predicated region
    $region18: #{tpu_custom_call.1} parent=1 // pred_check
      _
    $region19: #{tpu_custom_call.1} parent=1 // pred_check_branch
      %105 = sbr.rel (0) target = $region21
    $region20: #{tpu_custom_call.1} parent=1 // pred_region
      %s107 = ssub.s32 128, 128
      %108 = vsyncadd [#allocation4], %s107
      %s110 = sshll.u32 [#allocation7], 4
      %s111 = int_to_ptr.vmem [resolvable:$true] %s110
      %113 = dma.vmem_to_hbm [thread:$0]  %s111, 128, %s2, [#allocation4]
    $region21: #{tpu_custom_call.1} parent=1 // pred_fallthru
      _
    // Predicated region
    $region22: #{tpu_custom_call.1} parent=1 // pred_check
      _
    $region23: #{tpu_custom_call.1} parent=1 // pred_check_branch
      %115 = sbr.rel (0) target = $region25
    $region24: #{tpu_custom_call.1} parent=1 // pred_region
      %116 = dma.done [#allocation4], 128
    $region25: #{tpu_custom_call.1} parent=1 // pred_fallthru
      _
    %117 = vsyncpa [#allocation3], 1
    %118 = vsyncpa [#allocation6], 1
    %119 = vsyncpa [#allocation4], 1

</llo_original>
